<compile_context>
chip_gen: v5e
topology: v5e:2x2
jax: 0.10.0
libtpu: 0.0.40
codegen_flags: <defaults>
</compile_context>

<pallas_src>
import jax
import jax.numpy as jnp
from jax.experimental import pallas as pl
from jax.experimental.pallas import tpu as pltpu

LANE = 128                        # padded feature / hidden width (lane-dense)
_VMEM_LIMIT = 48 * 1024 * 1024    # leaves headroom on v7x (64 MiB physical per TC)


# --------------------------------------------------------------------------- kernels
def _gin1_kernel(xb_ref, xf_ref, adj_ref, eps1_ref,
                 w1a_ref, b1a_ref, w1b_ref, b1b_ref,
                 x1f_ref, x1b_ref):
    f32 = jnp.float32
    # neighbor sum for this destination-row tile: bf16 MXU matmul, f32 accumulate
    agg = jnp.dot(adj_ref[...], xb_ref[...], preferred_element_type=f32)
    h = (1.0 + eps1_ref[0, 0]) * xf_ref[...] + agg          # (1+eps)*x + sum_neighbors
    h = jnp.maximum(jnp.dot(h, w1a_ref[...], preferred_element_type=f32) + b1a_ref[...], 0.0)
    h = jnp.dot(h, w1b_ref[...], preferred_element_type=f32) + b1b_ref[...]
    x1 = jnp.maximum(h, 0.0)                                 # outer ReLU of conv1
    x1f_ref[...] = x1                                        # f32 copy (self term, pass 2)
    x1b_ref[...] = x1.astype(jnp.bfloat16)                   # bf16 copy (aggregation, pass 2)


def _gin2_pool_fc_kernel(x1b_ref, x1f_ref, adj_ref, pool_ref, eps2_ref,
                         w2a_ref, b2a_ref, w2b_ref, b2b_ref,
                         wf1_ref, bf1_ref, wf2_ref, bf2_ref, invc_ref,
                         out_ref, acc_ref):
    f32 = jnp.float32
    i = pl.program_id(0)

    @pl.when(i == 0)
    def _():
        acc_ref[...] = jnp.zeros_like(acc_ref)

    agg = jnp.dot(adj_ref[...], x1b_ref[...], preferred_element_type=f32)
    h = (1.0 + eps2_ref[0, 0]) * x1f_ref[...] + agg
    h = jnp.maximum(jnp.dot(h, w2a_ref[...], preferred_element_type=f32) + b2a_ref[...], 0.0)
    h = jnp.dot(h, w2b_ref[...], preferred_element_type=f32) + b2b_ref[...]
    x2 = jnp.maximum(h, 0.0)                                 # outer ReLU of conv2

    # partial (sum-)pool for this row tile; tiny f32 matmul, normalized to mean at the end
    acc_ref[...] += jnp.dot(pool_ref[...], x2, preferred_element_type=f32)

    @pl.when(i == pl.num_programs(0) - 1)
    def _():
        xp = acc_ref[...] * invc_ref[...]                    # global mean pool
        hh = jnp.maximum(
            jnp.dot(xp, wf1_ref[...], preferred_element_type=f32) + bf1_ref[...], 0.0
        ) + xp                                               # fc1 + ReLU + residual
        # fc2 (output width 1): VPU multiply + XLU lane-reduce instead of 1-wide MXU push
        out = jnp.sum(hh * wf2_ref[...], axis=-1, keepdims=True) + bf2_ref[0, 0]
        out_ref[...] = out.astype(out_ref.dtype)


# --------------------------------------------------------------------------- wrapper
def _pad_to(a, shape):
    out = jnp.zeros(shape, a.dtype)
    return out.at[tuple(slice(0, s) for s in a.shape)].set(a)


def gin_forward(x, edge_index, batch, num_graphs, params, *, tm=128):
    """params must be lane-padded via pad_params().  tm: node-row tile (multiple of 128;
    size it so 2 * tm * n_pad bf16 adjacency tiles stay well inside the VMEM budget)."""
    n = x.shape[0]
    n_pad = ((max(n, tm) + tm - 1) // tm) * tm
    grid = (n_pad // tm,)

    # ---- glue (plain JAX): dense adjacency, membership matrix, zero padding ----
    # TODO(synk): for sparse graphs (|E| << N^2) switch to scalar-prefetched edge-list
    # segment-sum aggregation (PrefetchScalarGridSpec) instead of the dense N^2 matmul.
    adj = jnp.zeros((n_pad, n_pad), jnp.float32)
    adj = adj.at[edge_index[1], edge_index[0]].add(1.0)       # A[dst, src] = #edges
    adj_bf16 = adj.astype(jnp.bfloat16)                       # small counts: exact in bf16

    batch_pad = jnp.full((n_pad,), num_graphs, jnp.int32).at[:n].set(batch)
    pool = (batch_pad[None, :] == jnp.arange(num_graphs)[:, None]).astype(jnp.float32)
    counts = pool.sum(axis=1, keepdims=True)
    invc = 1.0 / jnp.maximum(counts, 1.0)                     # [G, 1] f32

    x_f32 = _pad_to(x.astype(jnp.float32), (n_pad, LANE))
    x_bf16 = x_f32.astype(jnp.bfloat16)

    p = params
    full = lambda s: pl.BlockSpec(s, lambda i, s=s: tuple(0 for _ in s))  # resident, DMA'd once
    smem = pl.BlockSpec(memory_space=pltpu.MemorySpace.SMEM)

    # -------- pass 1: GINConv1 per destination-row tile (megacore 'parallel') --------
    x1_f32, x1_bf16 = pl.pallas_call(
        _gin1_kernel,
        grid=grid,
        in_specs=[
            full((n_pad, LANE)),                              # x (bf16), resident for agg
            pl.BlockSpec((tm, LANE), lambda i: (i, 0)),       # x (f32) self-term tile
            pl.BlockSpec((tm, n_pad), lambda i: (i, 0)),      # adjacency row tile (bf16)
            smem,                                             # eps1
            full((LANE, LANE)), full((1, LANE)),              # nn1: Linear(F,16)
            full((LANE, LANE)), full((1, LANE)),              # nn1: Linear(16,16)
        ],
        out_specs=[
            pl.BlockSpec((tm, LANE), lambda i: (i, 0)),       # x1 (f32)
            pl.BlockSpec((tm, LANE), lambda i: (i, 0)),       # x1 (bf16)
        ],
        out_shape=[
            jax.ShapeDtypeStruct((n_pad, LANE), jnp.float32),
            jax.ShapeDtypeStruct((n_pad, LANE), jnp.bfloat16),
        ],
        compiler_params=pltpu.CompilerParams(
            dimension_semantics=("parallel",),
            vmem_limit_bytes=_VMEM_LIMIT),
    )(x_bf16, x_f32, adj_bf16, p["eps1"],
      p["w1a"], p["b1a"], p["w1b"], p["b1b"])

    # -------- pass 2: GINConv2 + mean-pool accumulator + fc1/fc2 at last step --------
    out = pl.pallas_call(
        _gin2_pool_fc_kernel,
        grid=grid,
        in_specs=[
            full((n_pad, LANE)),                              # x1 bf16, resident for agg
            pl.BlockSpec((tm, LANE), lambda i: (i, 0)),       # x1 f32 self-term tile
            pl.BlockSpec((tm, n_pad), lambda i: (i, 0)),      # adjacency row tile (bf16)
            pl.BlockSpec((num_graphs, tm), lambda i: (0, i)), # membership columns (f32)
            smem,                                             # eps2
            full((LANE, LANE)), full((1, LANE)),              # nn2: Linear(16,32)
            full((LANE, LANE)), full((1, LANE)),              # nn2: Linear(32,32)
            full((LANE, LANE)), full((1, LANE)),              # fc1: Linear(32,32)
            full((1, LANE)),                                  # fc2 weight (as a row)
            smem,                                             # fc2 bias scalar
            full((num_graphs, 1)),                            # 1 / |V_g|
        ],
        out_specs=pl.BlockSpec((num_graphs, 1), lambda i: (0, 0)),
        out_shape=jax.ShapeDtypeStruct((num_graphs, 1), jnp.float32),
        scratch_shapes=[pltpu.VMEM((num_graphs, LANE), jnp.float32)],
        compiler_params=pltpu.CompilerParams(
            dimension_semantics=("arbitrary",),               # pooled accumulator axis
            vmem_limit_bytes=_VMEM_LIMIT),
    )(x1_bf16, x1_f32, adj_bf16, pool, p["eps2"],
      p["w2a"], p["b2a"], p["w2b"], p["b2b"],
      p["wf1"], p["bf1"], p["wf2_row"], p["bf2"], invc)

    return out[:, 0]                                          # .flatten() in the reference


# --------------------------------------------------------------------------- params
def init_linear(key, fan_in, fan_out):
    """PyTorch nn.Linear default init; weight stored [in, out] so the kernel does x @ W + b."""
    kw, kb = jax.random.split(key)
    bound = 1.0 / (fan_in ** 0.5)
    w = jax.random.uniform(kw, (fan_in, fan_out), jnp.float32, -bound, bound)
    b = jax.random.uniform(kb, (1, fan_out), jnp.float32, -bound, bound)
    return w, b


def init_params(key, num_node_features, dims=(16, 32)):
    keys = jax.random.split(key, 6)
    p = {}
    p["w1a"], p["b1a"] = init_linear(keys[0], num_node_features, dims[0])
    p["w1b"], p["b1b"] = init_linear(keys[1], dims[0], dims[0])
    p["w2a"], p["b2a"] = init_linear(keys[2], dims[0], dims[1])
    p["w2b"], p["b2b"] = init_linear(keys[3], dims[1], dims[1])
    p["wf1"], p["bf1"] = init_linear(keys[4], dims[1], 32)
    p["wf2"], p["bf2"] = init_linear(keys[5], 32, 1)
    # GINConv(train_eps=True) initializes eps to 0.0
    p["eps1"] = jnp.zeros((1, 1), jnp.float32)
    p["eps2"] = jnp.zeros((1, 1), jnp.float32)
    return p


def pad_params(p):
    """Zero-pad weights/biases to 128 lanes (exact: padded rows/cols contribute nothing)."""
    pp = {}
    for w, b in (("w1a", "b1a"), ("w1b", "b1b"), ("w2a", "b2a"),
                 ("w2b", "b2b"), ("wf1", "bf1")):
        pp[w] = _pad_to(p[w], (LANE, LANE))
        pp[b] = _pad_to(p[b], (1, LANE))
    pp["wf2_row"] = _pad_to(p["wf2"].T, (1, LANE))   # fc2 as multiply-reduce
    pp["bf2"] = p["bf2"].reshape(1, 1)
    pp["eps1"] = p["eps1"]
    pp["eps2"] = p["eps2"]
    return pp


# --------------------------------------------------------------------------- reference
def gin_reference(x, edge_index, batch, num_graphs, p):
    n = x.shape[0]
    adj = jnp.zeros((n, n), jnp.float32).at[edge_index[1], edge_index[0]].add(1.0)

    def mlp(h, wa, ba, wb, bb):
        return jnp.maximum(h @ wa + ba, 0.0) @ wb + bb

    x1 = jnp.maximum(mlp((1.0 + p["eps1"][0, 0]) * x + adj @ x,
                         p["w1a"], p["b1a"], p["w1b"], p["b1b"]), 0.0)
    x2 = jnp.maximum(mlp((1.0 + p["eps2"][0, 0]) * x1 + adj @ x1,
                         p["w2a"], p["b2a"], p["w2b"], p["b2b"]), 0.0)
    onehot = (batch[None, :] == jnp.arange(num_graphs)[:, None]).astype(jnp.float32)
    xp = (onehot / jnp.maximum(onehot.sum(1, keepdims=True), 1.0)) @ x2
    h = jnp.maximum(xp @ p["wf1"] + p["bf1"], 0.0) + xp
    return (h @ p["wf2"] + p["bf2"])[:, 0]


# --------------------------------------------------------------------------- main
if __name__ == "__main__":
    key = jax.random.PRNGKey(0)
    num_node_features = 8
    dims = (16, 32)
    num_graphs = 2
    nodes_per_graph = 8
    n_nodes = num_graphs * nodes_per_graph  # 16

    key, kparams = jax.random.split(key)
    params = init_params(kparams, num_node_features, dims)

    # deterministic graph: a bidirectional ring inside each of the 2 graphs
    src, dst = [], []
    for g in range(num_graphs):
        base = g * nodes_per_graph
        for i in range(nodes_per_graph):
            a = base + i
            b = base + (i + 1) % nodes_per_graph
            src += [a, b]
            dst += [b, a]
    edge_index = jnp.array([src, dst], dtype=jnp.int32)                               # [2, 32]
    batch = jnp.repeat(jnp.arange(num_graphs, dtype=jnp.int32), nodes_per_graph)      # [16]

    key, kx = jax.random.split(key)
    x = jax.random.normal(kx, (n_nodes, num_node_features), jnp.float32)              # [16, 8]

    out = gin_forward(x, edge_index, batch, num_graphs, pad_params(params))
    out = jax.block_until_ready(out)
    ref = gin_reference(x, edge_index, batch, num_graphs, params)

    assert out.shape == (num_graphs,), out.shape
    assert jnp.all(jnp.isfinite(out))
    assert jnp.allclose(out, ref, rtol=5e-2, atol=5e-2), (out, ref)
    print("KERNEL_OK")
</pallas_src>

<mosaic_0001>
module attributes {stable_mosaic.version = 11 : i64} {
  func.func @_gin1_kernel(%arg0: i32, %arg1: memref<128x128xbf16, #tpu.memory_space<vmem>>, %arg2: memref<128x128xf32, #tpu.memory_space<vmem>>, %arg3: memref<128x128xbf16, #tpu.memory_space<vmem>>, %arg4: memref<1x1xf32, #tpu.memory_space<smem>>, %arg5: memref<128x128xf32, #tpu.memory_space<vmem>>, %arg6: memref<1x128xf32, #tpu.memory_space<vmem>>, %arg7: memref<128x128xf32, #tpu.memory_space<vmem>>, %arg8: memref<1x128xf32, #tpu.memory_space<vmem>>, %arg9: memref<128x128xf32, #tpu.memory_space<vmem>>, %arg10: memref<128x128xbf16, #tpu.memory_space<vmem>>) attributes {dimension_semantics = [#tpu.dimension_semantics<parallel>], iteration_bounds = array<i64: 1>, scalar_prefetch = 0 : i64, scratch_operands = 0 : i64, tpu.core_type = #tpu.core_type<tc>, window_params = [{pipeline_mode = #tpu.pipeline_mode<synchronous>, transform_indices = @transform_0, window_bounds = array<i64: 128, 128>}, {transform_indices = @transform_1, window_bounds = array<i64: 128, 128>}, {transform_indices = @transform_2, window_bounds = array<i64: 128, 128>}, {transform_indices = @transform_3, window_bounds = array<i64: 1, 1>}, {pipeline_mode = #tpu.pipeline_mode<synchronous>, transform_indices = @transform_4, window_bounds = array<i64: 128, 128>}, {pipeline_mode = #tpu.pipeline_mode<synchronous>, transform_indices = @transform_5, window_bounds = array<i64: 1, 128>}, {pipeline_mode = #tpu.pipeline_mode<synchronous>, transform_indices = @transform_6, window_bounds = array<i64: 128, 128>}, {pipeline_mode = #tpu.pipeline_mode<synchronous>, transform_indices = @transform_7, window_bounds = array<i64: 1, 128>}, {transform_indices = @transform_8, window_bounds = array<i64: 128, 128>}, {transform_indices = @transform_9, window_bounds = array<i64: 128, 128>}]} {
    %c0 = arith.constant 0 : index
    %c0_0 = arith.constant 0 : index
    %0 = vector.load %arg3[%c0, %c0_0] : memref<128x128xbf16, #tpu.memory_space<vmem>>, vector<128x128xbf16>
    %c0_1 = arith.constant 0 : index
    %c0_2 = arith.constant 0 : index
    %1 = vector.load %arg1[%c0_1, %c0_2] : memref<128x128xbf16, #tpu.memory_space<vmem>>, vector<128x128xbf16>
    %cst = arith.constant dense<0.000000e+00> : vector<128x128xf32>
    %2 = tpu.matmul %0, %1, %cst {dimension_numbers = #tpu.dot_dimension_numbers<[1], [0], [0], [1], [0, 0, 1, 1], [], []>} : vector<128x128xbf16>, vector<128x128xbf16>, vector<128x128xf32> -> vector<128x128xf32>
    %c0_3 = arith.constant 0 : index
    %c0_4 = arith.constant 0 : index
    %3 = memref.load %arg4[%c0_3, %c0_4] : memref<1x1xf32, #tpu.memory_space<smem>>
    %cst_5 = arith.constant 1.000000e+00 : f32
    %4 = arith.addf %cst_5, %3 : f32
    %c0_6 = arith.constant 0 : index
    %c0_7 = arith.constant 0 : index
    %5 = vector.load %arg2[%c0_6, %c0_7] : memref<128x128xf32, #tpu.memory_space<vmem>>, vector<128x128xf32>
    %6 = vector.broadcast %4 : f32 to vector<128x128xf32>
    %7 = arith.mulf %6, %5 : vector<128x128xf32>
    %8 = arith.addf %7, %2 : vector<128x128xf32>
    %c0_8 = arith.constant 0 : index
    %c0_9 = arith.constant 0 : index
    %9 = vector.load %arg5[%c0_8, %c0_9] : memref<128x128xf32, #tpu.memory_space<vmem>>, vector<128x128xf32>
    %cst_10 = arith.constant dense<0.000000e+00> : vector<128x128xf32>
    %10 = tpu.matmul %8, %9, %cst_10 {dimension_numbers = #tpu.dot_dimension_numbers<[1], [0], [0], [1], [0, 0, 1, 1], [], []>} : vector<128x128xf32>, vector<128x128xf32>, vector<128x128xf32> -> vector<128x128xf32>
    %c0_11 = arith.constant 0 : index
    %c0_12 = arith.constant 0 : index
    %11 = vector.load %arg6[%c0_11, %c0_12] : memref<1x128xf32, #tpu.memory_space<vmem>>, vector<1x128xf32>
    %12 = vector.broadcast %11 : vector<1x128xf32> to vector<128x128xf32>
    %13 = arith.addf %10, %12 : vector<128x128xf32>
    %cst_13 = arith.constant 0.000000e+00 : f32
    %14 = vector.broadcast %cst_13 : f32 to vector<128x128xf32>
    %15 = arith.maximumf %13, %14 : vector<128x128xf32>
    %c0_14 = arith.constant 0 : index
    %c0_15 = arith.constant 0 : index
    %16 = vector.load %arg7[%c0_14, %c0_15] : memref<128x128xf32, #tpu.memory_space<vmem>>, vector<128x128xf32>
    %cst_16 = arith.constant dense<0.000000e+00> : vector<128x128xf32>
    %17 = tpu.matmul %15, %16, %cst_16 {dimension_numbers = #tpu.dot_dimension_numbers<[1], [0], [0], [1], [0, 0, 1, 1], [], []>} : vector<128x128xf32>, vector<128x128xf32>, vector<128x128xf32> -> vector<128x128xf32>
    %c0_17 = arith.constant 0 : index
    %c0_18 = arith.constant 0 : index
    %18 = vector.load %arg8[%c0_17, %c0_18] : memref<1x128xf32, #tpu.memory_space<vmem>>, vector<1x128xf32>
    %19 = vector.broadcast %18 : vector<1x128xf32> to vector<128x128xf32>
    %20 = arith.addf %17, %19 : vector<128x128xf32>
    %cst_19 = arith.constant 0.000000e+00 : f32
    %21 = vector.broadcast %cst_19 : f32 to vector<128x128xf32>
    %22 = arith.maximumf %20, %21 : vector<128x128xf32>
    %c0_20 = arith.constant 0 : index
    %c0_21 = arith.constant 0 : index
    %23 = vector.load %arg9[%c0_20, %c0_21] : memref<128x128xf32, #tpu.memory_space<vmem>>, vector<128x128xf32>
    tpu.vector_store %arg9[%c0_20, %c0_21], %22 {strides = array<i32>} : memref<128x128xf32, #tpu.memory_space<vmem>>, vector<128x128xf32>,
    %24 = arith.truncf %22 : vector<128x128xf32> to vector<128x128xbf16>
    %c0_22 = arith.constant 0 : index
    %c0_23 = arith.constant 0 : index
    %25 = vector.load %arg10[%c0_22, %c0_23] : memref<128x128xbf16, #tpu.memory_space<vmem>>, vector<128x128xbf16>
    tpu.vector_store %arg10[%c0_22, %c0_23], %24 {strides = array<i32>} : memref<128x128xbf16, #tpu.memory_space<vmem>>, vector<128x128xbf16>,
    return
  }
  func.func @transform_0(%arg0: i32) -> (i32, i32) {
    %c0_i32 = arith.constant 0 : i32
    %c0_i32_0 = arith.constant 0 : i32
    %c0_i32_1 = arith.constant 0 : i32
    return %c0_i32, %c0_i32_0 : i32, i32
  }
  func.func @transform_1(%arg0: i32) -> (i32, i32) {
    %c0_i32 = arith.constant 0 : i32
    %c0_i32_0 = arith.constant 0 : i32
    return %arg0, %c0_i32 : i32, i32
  }
  func.func @transform_2(%arg0: i32) -> (i32, i32) {
    %c0_i32 = arith.constant 0 : i32
    %c0_i32_0 = arith.constant 0 : i32
    return %arg0, %c0_i32 : i32, i32
  }
  func.func @transform_3(%arg0: i32) -> (i32, i32) {
    %c0_i32 = arith.constant 0 : i32
    %c0_i32_0 = arith.constant 0 : i32
    %c0_i32_1 = arith.constant 0 : i32
    return %c0_i32, %c0_i32_0 : i32, i32
  }
  func.func @transform_4(%arg0: i32) -> (i32, i32) {
    %c0_i32 = arith.constant 0 : i32
    %c0_i32_0 = arith.constant 0 : i32
    %c0_i32_1 = arith.constant 0 : i32
    return %c0_i32, %c0_i32_0 : i32, i32
  }
  func.func @transform_5(%arg0: i32) -> (i32, i32) {
    %c0_i32 = arith.constant 0 : i32
    %c0_i32_0 = arith.constant 0 : i32
    %c0_i32_1 = arith.constant 0 : i32
    return %c0_i32, %c0_i32_0 : i32, i32
  }
  func.func @transform_6(%arg0: i32) -> (i32, i32) {
    %c0_i32 = arith.constant 0 : i32
    %c0_i32_0 = arith.constant 0 : i32
    %c0_i32_1 = arith.constant 0 : i32
    return %c0_i32, %c0_i32_0 : i32, i32
  }
  func.func @transform_7(%arg0: i32) -> (i32, i32) {
    %c0_i32 = arith.constant 0 : i32
    %c0_i32_0 = arith.constant 0 : i32
    %c0_i32_1 = arith.constant 0 : i32
    return %c0_i32, %c0_i32_0 : i32, i32
  }
  func.func @transform_8(%arg0: i32) -> (i32, i32) {
    %c0_i32 = arith.constant 0 : i32
    %c0_i32_0 = arith.constant 0 : i32
    return %arg0, %c0_i32 : i32, i32
  }
  func.func @transform_9(%arg0: i32) -> (i32, i32) {
    %c0_i32 = arith.constant 0 : i32
    %c0_i32_0 = arith.constant 0 : i32
    return %arg0, %c0_i32 : i32, i32
  }
}

</mosaic_0001>

<llo_original>
// kernel: tpu_custom_call.1
$region0: #{tpu_custom_call.1}
  #allocation0 [shape = 'u32[]', space=smem, size = 0x4, offset = 0x4, fixed_abs, tag = 'smem constant byte address 0x4 - core index']
  #allocation1 [shape = 'u32[72,128]{1,0:T(1,128)}', space=vmem, size = 0x9000, scoped, tag = 'internal scratch']
  #allocation2 [shape = 'f32[1,1]{1,0:T(1,128)S(6)}', space=smem, size = 0x200, scoped, tag = 'scoped memory for tpu_custom_call.1']
  %s0 = inlined_call_operand.hbm [shape: bf16[128,128], index: 0, kind: input, shape index: {}]
  %s1 = inlined_call_operand.hbm [shape: f32[128,128], index: 1, kind: input, shape index: {}]
  %s2 = inlined_call_operand.hbm [shape: bf16[128,128], index: 2, kind: input, shape index: {}]
  %s3 = inlined_call_operand.<no memory space> [shape: f32[1,1], index: 3, kind: input, shape index: {}]
  %s4 = inlined_call_operand.hbm [shape: f32[128,128], index: 4, kind: input, shape index: {}]
  %s5 = inlined_call_operand.vmem [shape: f32[1,128], index: 5, kind: input, shape index: {}]
  %s6 = inlined_call_operand.hbm [shape: f32[128,128], index: 6, kind: input, shape index: {}]
  %s7 = inlined_call_operand.vmem [shape: f32[1,128], index: 7, kind: input, shape index: {}]
  %s8 = inlined_call_operand.hbm [shape: f32[128,128], index: 8, kind: output, shape index: {0}]
  %s9 = inlined_call_operand.hbm [shape: bf16[128,128], index: 9, kind: output, shape index: {1}]
  %10 = xla_tuple %s8, %s9
  %s11 = sld [smem:[#allocation0]]
  $region70: #{tpu_custom_call.1} parent=0
    _
  %s13 = ssub.s32 1, %s11
  %s14 = scalar_select 0, %s13, %s11
  %15 = sst [smem:[#allocation2]] %s3
  $region1: #{tpu_custom_call.1} parent=0
    #allocation3 [shape = 'u8[32768]{0}', space=vmem, size = 0x8000, scoped, tag = 'input window, operand 0, single buffered']
    #allocation4 [shape = 's32[1]{0}', space=sflag, size = 0x4, scoped, tag = 'scoped memory for tpu_custom_call.1']
    #allocation5 [shape = 's32[1]{0}', space=sflag, size = 0x4, scoped, tag = 'scoped memory for tpu_custom_call.1']
    #allocation6 [shape = 'u8[65536]{0}', space=vmem, size = 0x10000, scoped, tag = 'input window, operand 1, single buffered']
    #allocation7 [shape = 's32[1]{0}', space=sflag, size = 0x4, scoped, tag = 'scoped memory for tpu_custom_call.1']
    #allocation8 [shape = 'u8[32768]{0}', space=vmem, size = 0x8000, scoped, tag = 'input window, operand 2, single buffered']
    #allocation9 [shape = 'u8[65536]{0}', space=vmem, size = 0x10000, scoped, tag = 'input window, operand 4, single buffered']
    #allocation10 [shape = 's32[1]{0}', space=sflag, size = 0x4, scoped, tag = 'scoped memory for tpu_custom_call.1']
    #allocation11 [shape = 'u8[65536]{0}', space=vmem, size = 0x10000, scoped, tag = 'input window, operand 6, single buffered']
    #allocation12 [shape = 'u8[65536]{0}', space=vmem, size = 0x10000, scoped, tag = 'output window, operand 0, single buffered']
    #allocation13 [shape = 'u8[32768]{0}', space=vmem, size = 0x8000, scoped, tag = 'output window, operand 1, single buffered']
    #allocation14 [shape = 's32[1]{0}', space=sflag, size = 0x4, scoped, tag = 'scoped memory for tpu_custom_call.1']
    %16 = vsyncpa [#allocation4], 0
    %17 = vsyncpa [#allocation7], 0
    %18 = vsyncpa [#allocation10], 0
    %19 = vsyncpa [#allocation5], 0
    %20 = vsyncpa [#allocation14], 0
    // Predicated region
    $region2: #{tpu_custom_call.1} parent=1 // pred_check
      _
    $region3: #{tpu_custom_call.1} parent=1 // pred_check_branch
      %22 = sbr.rel (0) target = $region5
    $region4: #{tpu_custom_call.1} parent=1 // pred_region
      %24 = vsyncadd [#allocation4], 0
      %s25 = sshll.u32 %s0, 4
      %s26 = int_to_ptr.hbm [resolvable:$true] %s25
      %s27 = sshll.u32 [#allocation3], 4
      %s28 = int_to_ptr.vmem [resolvable:$true] %s27
      %33 = dma.hbm_to_vmem [thread:$0]  %s26, 1024, %s28, [#allocation4], 64, 64, 4
    $region5: #{tpu_custom_call.1} parent=1 // pred_fallthru
      _
    // Predicated region
    $region6: #{tpu_custom_call.1} parent=1 // pred_check
      _
    $region7: #{tpu_custom_call.1} parent=1 // pred_check_branch
      %35 = sbr.rel (0) target = $region9
    $region8: #{tpu_custom_call.1} parent=1 // pred_region
      %37 = vsyncadd [#allocation7], 0
      %s38 = sshll.u32 %s1, 4
      %s39 = int_to_ptr.hbm [resolvable:$true] %s38
      %s40 = sshll.u32 [#allocation6], 4
      %s41 = int_to_ptr.vmem [resolvable:$true] %s40
      %46 = dma.hbm_to_vmem [thread:$0]  %s39, 2048, %s41, [#allocation7], 128, 128, 8
    $region9: #{tpu_custom_call.1} parent=1 // pred_fallthru
      _
    // Predicated region
    $region10: #{tpu_custom_call.1} parent=1 // pred_check
      _
    $region11: #{tpu_custom_call.1} parent=1 // pred_check_branch
      %48 = sbr.rel (0) target = $region13
    $region12: #{tpu_custom_call.1} parent=1 // pred_region
      %50 = vsyncadd [#allocation7], 0
      %s51 = sshll.u32 %s2, 4
      %s52 = int_to_ptr.hbm [resolvable:$true] %s51
      %s53 = sshll.u32 [#allocation8], 4
      %s54 = int_to_ptr.vmem [resolvable:$true] %s53
      %59 = dma.hbm_to_vmem [thread:$0]  %s52, 1024, %s54, [#allocation7], 64, 64, 4
    $region13: #{tpu_custom_call.1} parent=1 // pred_fallthru
      _
    // Predicated region
    $region14: #{tpu_custom_call.1} parent=1 // pred_check
      _
    $region15: #{tpu_custom_call.1} parent=1 // pred_check_branch
      %61 = sbr.rel (0) target = $region17
    $region16: #{tpu_custom_call.1} parent=1 // pred_region
      _
    $region17: #{tpu_custom_call.1} parent=1 // pred_fallthru
      _
    // Predicated region
    $region18: #{tpu_custom_call.1} parent=1 // pred_check
      _
    $region19: #{tpu_custom_call.1} parent=1 // pred_check_branch
      %63 = sbr.rel (0) target = $region21
    $region20: #{tpu_custom_call.1} parent=1 // pred_region
      %65 = vsyncadd [#allocation10], 0
      %s66 = sshll.u32 %s4, 4
      %s67 = int_to_ptr.hbm [resolvable:$true] %s66
      %s68 = sshll.u32 [#allocation9], 4
      %s69 = int_to_ptr.vmem [resolvable:$true] %s68
      %74 = dma.hbm_to_vmem [thread:$0]  %s67, 2048, %s69, [#allocation10], 128, 128, 8
    $region21: #{tpu_custom_call.1} parent=1 // pred_fallthru
      _
    // Predicated region
    $region22: #{tpu_custom_call.1} parent=1 // pred_check
      _
    $region23: #{tpu_custom_call.1} parent=1 // pred_check_branch
      %76 = sbr.rel (0) target = $region25
    $region24: #{tpu_custom_call.1} parent=1 // pred_region
      _
    $region25: #{tpu_custom_call.1} parent=1 // pred_fallthru
      _
    // Predicated region
    $region26: #{tpu_custom_call.1} parent=1 // pred_check
      _
    $region27: #{tpu_custom_call.1} parent=1 // pred_check_branch
      %78 = sbr.rel (0) target = $region29
    $region28: #{tpu_custom_call.1} parent=1 // pred_region
      %80 = vsyncadd [#allocation10], 0
      %s81 = sshll.u32 %s6, 4
      %s82 = int_to_ptr.hbm [resolvable:$true] %s81
      %s83 = sshll.u32 [#allocation11], 4
      %s84 = int_to_ptr.vmem [resolvable:$true] %s83
      %89 = dma.hbm_to_vmem [thread:$0]  %s82, 2048, %s84, [#allocation10], 128, 128, 8
    $region29: #{tpu_custom_call.1} parent=1 // pred_fallthru
      _
    // Predicated region
    $region30: #{tpu_custom_call.1} parent=1 // pred_check
      _
    $region31: #{tpu_custom_call.1} parent=1 // pred_check_branch
      %91 = sbr.rel (0) target = $region33
    $region32: #{tpu_custom_call.1} parent=1 // pred_region
      _
    $region33: #{tpu_custom_call.1} parent=1 // pred_fallthru
      _
    // Predicated region
    $region34: #{tpu_custom_call.1} parent=1 // pred_check
      _
    $region35: #{tpu_custom_call.1} parent=1 // pred_check_branch
      %93 = sbr.rel (0) target = $region37
    $region36: #{tpu_custom_call.1} parent=1 // pred_region
      %95 = dma.done [#allocation4], 1024
    $region37: #{tpu_custom_call.1} parent=1 // pred_fallthru
      _
    // Predicated region
    $region38: #{tpu_custom_call.1} parent=1 // pred_check
      _
    $region39: #{tpu_custom_call.1} parent=1 // pred_check_branch
      %97 = sbr.rel (0) target = $region41
    $region40: #{tpu_custom_call.1} parent=1 // pred_region
      %99 = dma.done [#allocation7], 2048
    $region41: #{tpu_custom_call.1} parent=1 // pred_fallthru
      _
    // Predicated region
    $region42: #{tpu_custom_call.1} parent=1 // pred_check
      _
    $region43: #{tpu_custom_call.1} parent=1 // pred_check_branch
      %101 = sbr.rel (0) target = $region45
    $region44: #{tpu_custom_call.1} parent=1 // pred_region
      %103 = dma.done [#allocation7], 1024
    $region45: #{tpu_custom_call.1} parent=1 // pred_fallthru
      _
    // Predicated region
    $region46: #{tpu_custom_call.1} parent=1 // pred_check
      _
    $region47: #{tpu_custom_call.1} parent=1 // pred_check_branch
      %105 = sbr.rel (0) target = $region49
    $region48: #{tpu_custom_call.1} parent=1 // pred_region
      %107 = dma.done [#allocation10], 2048
    $region49: #{tpu_custom_call.1} parent=1 // pred_fallthru
      _
    // Predicated region
    $region50: #{tpu_custom_call.1} parent=1 // pred_check
      _
    $region51: #{tpu_custom_call.1} parent=1 // pred_check_branch
      %109 = sbr.rel (0) target = $region53
    $region52: #{tpu_custom_call.1} parent=1 // pred_region
      %111 = dma.done [#allocation10], 2048
    $region53: #{tpu_custom_call.1} parent=1 // pred_fallthru
      _
    %v112 = vld [vmem:[#allocation8] sm:$0xf]
    %v113 = vld [vmem:[#allocation8 + $0x4] sm:$0xf]
    %v114 = vld [vmem:[#allocation8 + $0x8] sm:$0xf]
    %v115 = vld [vmem:[#allocation8 + $0xc] sm:$0xf]
    %v116 = vld [vmem:[#allocation8 + $0x10] sm:$0xf]
    %v117 = vld [vmem:[#allocation8 + $0x14] sm:$0xf]
    %v118 = vld [vmem:[#allocation8 + $0x18] sm:$0xf]
    %v119 = vld [vmem:[#allocation8 + $0x1c] sm:$0xf]
    %v120 = vld [vmem:[#allocation8 + $0x20] sm:$0xf]
    %v121 = vld [vmem:[#allocation8 + $0x24] sm:$0xf]
    %v122 = vld [vmem:[#allocation8 + $0x28] sm:$0xf]
    %v123 = vld [vmem:[#allocation8 + $0x2c] sm:$0xf]
    %v124 = vld [vmem:[#allocation8 + $0x30] sm:$0xf]
    %v125 = vld [vmem:[#allocation8 + $0x34] sm:$0xf]
    %v126 = vld [vmem:[#allocation8 + $0x38] sm:$0xf]
    %v127 = vld [vmem:[#allocation8 + $0x3c] sm:$0xf]
    %v128 = vld [vmem:[#allocation3] sm:$0xf]
    %v129 = vld [vmem:[#allocation3 + $0x4] sm:$0xf]
    %v130 = vld [vmem:[#allocation3 + $0x8] sm:$0xf]
    %v131 = vld [vmem:[#allocation3 + $0xc] sm:$0xf]
    %v132 = vld [vmem:[#allocation3 + $0x10] sm:$0xf]
    %v133 = vld [vmem:[#allocation3 + $0x14] sm:$0xf]
    %v134 = vld [vmem:[#allocation3 + $0x18] sm:$0xf]
    %v135 = vld [vmem:[#allocation3 + $0x1c] sm:$0xf]
    %v136 = vld [vmem:[#allocation3 + $0x20] sm:$0xf]
    %v137 = vld [vmem:[#allocation3 + $0x24] sm:$0xf]
    %v138 = vld [vmem:[#allocation3 + $0x28] sm:$0xf]
    %v139 = vld [vmem:[#allocation3 + $0x2c] sm:$0xf]
    %v140 = vld [vmem:[#allocation3 + $0x30] sm:$0xf]
    %v141 = vld [vmem:[#allocation3 + $0x34] sm:$0xf]
    %v142 = vld [vmem:[#allocation3 + $0x38] sm:$0xf]
    %v143 = vld [vmem:[#allocation3 + $0x3c] sm:$0xf]
    %v160 = vunpack.c.l.b16 %v112
    %v161 = vunpack.c.l.b16 %v113
    %v162 = vunpack.c.l.b16 %v114
    %v163 = vunpack.c.l.b16 %v115
    %v164 = vunpack.c.l.b16 %v116
    %v165 = vunpack.c.l.b16 %v117
    %v166 = vunpack.c.l.b16 %v118
    %v167 = vunpack.c.l.b16 %v119
    %v168 = vunpack.c.l.b16 %v120
    %v169 = vunpack.c.l.b16 %v121
    %v170 = vunpack.c.l.b16 %v122
    %v171 = vunpack.c.l.b16 %v123
    %v172 = vunpack.c.l.b16 %v124
    %v173 = vunpack.c.l.b16 %v125
    %v174 = vunpack.c.l.b16 %v126
    %v175 = vunpack.c.l.b16 %v127
    %v176 = vpack.c.b16 %v161, %v160
    %v177 = vpack.c.b16 %v163, %v162
    %v178 = vpack.c.b16 %v165, %v164
    %v179 = vpack.c.b16 %v167, %v166
    %v180 = vpack.c.b16 %v169, %v168
    %v181 = vpack.c.b16 %v171, %v170
    %v182 = vpack.c.b16 %v173, %v172
    %v183 = vpack.c.b16 %v175, %v174
    %v208 = vunpack.c.l.b16 %v128
    %v209 = vunpack.c.l.b16 %v129
    %v210 = vunpack.c.l.b16 %v130
    %v211 = vunpack.c.l.b16 %v131
    %v212 = vunpack.c.l.b16 %v132
    %v213 = vunpack.c.l.b16 %v133
    %v214 = vunpack.c.l.b16 %v134
    %v215 = vunpack.c.l.b16 %v135
    %v216 = vunpack.c.l.b16 %v136
    %v217 = vunpack.c.l.b16 %v137
    %v218 = vunpack.c.l.b16 %v138
    %v219 = vunpack.c.l.b16 %v139
    %v220 = vunpack.c.l.b16 %v140
    %v221 = vunpack.c.l.b16 %v141
    %v222 = vunpack.c.l.b16 %v142
    %v223 = vunpack.c.l.b16 %v143
    %v224 = vpack.c.b16 %v209, %v208
    %v225 = vpack.c.b16 %v211, %v210
    %v226 = vpack.c.b16 %v213, %v212
    %v227 = vpack.c.b16 %v215, %v214
    %v228 = vpack.c.b16 %v217, %v216
    %v229 = vpack.c.b16 %v219, %v218
    %v230 = vpack.c.b16 %v221, %v220
    %v231 = vpack.c.b16 %v223, %v222
    %240 = vmatpush.bf16.msra.mxu0 %v231
    %241 = vmatpush.bf16.msra.mxu0 %v230
    %242 = vmatpush.bf16.msra.mxu0 %v229
    %243 = vmatpush.bf16.msra.mxu0 %v228
    %244 = vmatpush.bf16.msra.mxu0 %v227
    %245 = vmatpush.bf16.msra.mxu0 %v226
    %246 = vmatpush.bf16.msra.mxu0 %v225
    %247 = vmatpush.bf16.msra.mxu0 %v224
    %248 = vmatmul.bf16.gmra.mxu0 %v176
    %v249 = vpop.f32.mrf.mxu0
    %v250 = vadd.f32 0.0, %v249
    %v251 = vpop.f32.mrf.mxu0
    %v252 = vadd.f32 0.0, %v251
    %253 = vmatmul.bf16.gmra.mxu0 %v177
    %v254 = vpop.f32.mrf.mxu0
    %v255 = vadd.f32 0.0, %v254
    %v256 = vpop.f32.mrf.mxu0
    %v257 = vadd.f32 0.0, %v256
    %258 = vmatmul.bf16.gmra.mxu0 %v178
    %v259 = vpop.f32.mrf.mxu0
    %v260 = vadd.f32 0.0, %v259
    %v261 = vpop.f32.mrf.mxu0
    %v262 = vadd.f32 0.0, %v261
    %263 = vmatmul.bf16.gmra.mxu0 %v179
    %v264 = vpop.f32.mrf.mxu0
    %v265 = vadd.f32 0.0, %v264
    %v266 = vpop.f32.mrf.mxu0
    %v267 = vadd.f32 0.0, %v266
    %268 = vmatmul.bf16.gmra.mxu0 %v180
    %v269 = vpop.f32.mrf.mxu0
    %v270 = vadd.f32 0.0, %v269
    %v271 = vpop.f32.mrf.mxu0
    %v272 = vadd.f32 0.0, %v271
    %273 = vmatmul.bf16.gmra.mxu0 %v181
    %v274 = vpop.f32.mrf.mxu0
    %v275 = vadd.f32 0.0, %v274
    %v276 = vpop.f32.mrf.mxu0
    %v277 = vadd.f32 0.0, %v276
    %278 = vmatmul.bf16.gmra.mxu0 %v182
    %v279 = vpop.f32.mrf.mxu0
    %v280 = vadd.f32 0.0, %v279
    %v281 = vpop.f32.mrf.mxu0
    %v282 = vadd.f32 0.0, %v281
    %283 = vmatmul.bf16.gmra.mxu0 %v183
    %v284 = vpop.f32.mrf.mxu0
    %v285 = vadd.f32 0.0, %v284
    %v286 = vpop.f32.mrf.mxu0
    %v287 = vadd.f32 0.0, %v286
    %288 = vdwg.mxu0
    %s289 = sld [smem:[#allocation2]]
    %s290 = sadd.f32 %s289, 1.0
    %v291 = vld [vmem:[#allocation6] sm:$0xff]
    %v292 = vld [vmem:[#allocation6 + $0x8] sm:$0xff]
    %v293 = vld [vmem:[#allocation6 + $0x10] sm:$0xff]
    %v294 = vld [vmem:[#allocation6 + $0x18] sm:$0xff]
    %v295 = vld [vmem:[#allocation6 + $0x20] sm:$0xff]
    %v296 = vld [vmem:[#allocation6 + $0x28] sm:$0xff]
    %v297 = vld [vmem:[#allocation6 + $0x30] sm:$0xff]
    %v298 = vld [vmem:[#allocation6 + $0x38] sm:$0xff]
    %v299 = vld [vmem:[#allocation6 + $0x40] sm:$0xff]
    %v300 = vld [vmem:[#allocation6 + $0x48] sm:$0xff]
    %v301 = vld [vmem:[#allocation6 + $0x50] sm:$0xff]
    %v302 = vld [vmem:[#allocation6 + $0x58] sm:$0xff]
    %v303 = vld [vmem:[#allocation6 + $0x60] sm:$0xff]
    %v304 = vld [vmem:[#allocation6 + $0x68] sm:$0xff]
    %v305 = vld [vmem:[#allocation6 + $0x70] sm:$0xff]
    %v306 = vld [vmem:[#allocation6 + $0x78] sm:$0xff]
    %v307 = vstv %s290
    %v308 = vmul.f32 %v307, %v291
    %v309 = vmul.f32 %v307, %v292
    %v310 = vmul.f32 %v307, %v293
    %v311 = vmul.f32 %v307, %v294
    %v312 = vmul.f32 %v307, %v295
    %v313 = vmul.f32 %v307, %v296
    %v314 = vmul.f32 %v307, %v297
    %v315 = vmul.f32 %v307, %v298
    %v316 = vmul.f32 %v307, %v299
    %v317 = vmul.f32 %v307, %v300
    %v318 = vmul.f32 %v307, %v301
    %v319 = vmul.f32 %v307, %v302
    %v320 = vmul.f32 %v307, %v303
    %v321 = vmul.f32 %v307, %v304
    %v322 = vmul.f32 %v307, %v305
    %v323 = vmul.f32 %v307, %v306
    %v324 = vadd.f32 %v308, %v250
    %v325 = vadd.f32 %v309, %v252
    %v326 = vadd.f32 %v310, %v255
    %v327 = vadd.f32 %v311, %v257
    %v328 = vadd.f32 %v312, %v260
    %v329 = vadd.f32 %v313, %v262
    %v330 = vadd.f32 %v314, %v265
    %v331 = vadd.f32 %v315, %v267
    %v332 = vadd.f32 %v316, %v270
    %v333 = vadd.f32 %v317, %v272
    %v334 = vadd.f32 %v318, %v275
    %v335 = vadd.f32 %v319, %v277
    %v336 = vadd.f32 %v320, %v280
    %v337 = vadd.f32 %v321, %v282
    %v338 = vadd.f32 %v322, %v285
    %v339 = vadd.f32 %v323, %v287
    %v340 = vld [vmem:[#allocation9] sm:$0xff]
    %v341 = vld [vmem:[#allocation9 + $0x8] sm:$0xff]
    %v342 = vld [vmem:[#allocation9 + $0x10] sm:$0xff]
    %v343 = vld [vmem:[#allocation9 + $0x18] sm:$0xff]
    %v344 = vld [vmem:[#allocation9 + $0x20] sm:$0xff]
    %v345 = vld [vmem:[#allocation9 + $0x28] sm:$0xff]
    %v346 = vld [vmem:[#allocation9 + $0x30] sm:$0xff]
    %v347 = vld [vmem:[#allocation9 + $0x38] sm:$0xff]
    %v348 = vld [vmem:[#allocation9 + $0x40] sm:$0xff]
    %v349 = vld [vmem:[#allocation9 + $0x48] sm:$0xff]
    %v350 = vld [vmem:[#allocation9 + $0x50] sm:$0xff]
    %v351 = vld [vmem:[#allocation9 + $0x58] sm:$0xff]
    %v352 = vld [vmem:[#allocation9 + $0x60] sm:$0xff]
    %v353 = vld [vmem:[#allocation9 + $0x68] sm:$0xff]
    %v354 = vld [vmem:[#allocation9 + $0x70] sm:$0xff]
    %v355 = vld [vmem:[#allocation9 + $0x78] sm:$0xff]
    %v356 = vld [vmem:[%s5] sm:$0x1]
    %v358 = vperm.slane %v356, 0
    %360 = vmatpush.msra.mxu0 %v355
    %361 = vmatpush.msra.mxu0 %v354
    %362 = vmatpush.msra.mxu0 %v353
    %363 = vmatpush.msra.mxu0 %v352
    %364 = vmatpush.msra.mxu0 %v351
    %365 = vmatpush.msra.mxu0 %v350
    %366 = vmatpush.msra.mxu0 %v349
    %367 = vmatpush.msra.mxu0 %v348
    %368 = vmatpush.msra.mxu0 %v347
    %369 = vmatpush.msra.mxu0 %v346
    %370 = vmatpush.msra.mxu0 %v345
    %371 = vmatpush.msra.mxu0 %v344
    %372 = vmatpush.msra.mxu0 %v343
    %373 = vmatpush.msra.mxu0 %v342
    %374 = vmatpush.msra.mxu0 %v341
    %375 = vmatpush.msra.mxu0 %v340
    %376 = vmatmul.f32.gmra.mxu0 %v324
    %v377 = vpop.f32.mrf.mxu0
    %v378 = vadd.f32 %v358, %v377
    %379 = vmatmul.f32.gmra.mxu0 %v325
    %v380 = vpop.f32.mrf.mxu0
    %v381 = vadd.f32 %v358, %v380
    %382 = vmatmul.f32.gmra.mxu0 %v326
    %v383 = vpop.f32.mrf.mxu0
    %v384 = vadd.f32 %v358, %v383
    %385 = vmatmul.f32.gmra.mxu0 %v327
    %v386 = vpop.f32.mrf.mxu0
    %v387 = vadd.f32 %v358, %v386
    %388 = vmatmul.f32.gmra.mxu0 %v328
    %v389 = vpop.f32.mrf.mxu0
    %v390 = vadd.f32 %v358, %v389
    %391 = vmatmul.f32.gmra.mxu0 %v329
    %v392 = vpop.f32.mrf.mxu0
    %v393 = vadd.f32 %v358, %v392
    %394 = vmatmul.f32.gmra.mxu0 %v330
    %v395 = vpop.f32.mrf.mxu0
    %v396 = vadd.f32 %v358, %v395
    %397 = vmatmul.f32.gmra.mxu0 %v331
    %v398 = vpop.f32.mrf.mxu0
    %v399 = vadd.f32 %v358, %v398
    %400 = vmatmul.f32.gmra.mxu0 %v332
    %v401 = vpop.f32.mrf.mxu0
    %v402 = vadd.f32 %v358, %v401
    %403 = vmatmul.f32.gmra.mxu0 %v333
    %v404 = vpop.f32.mrf.mxu0
    %v405 = vadd.f32 %v358, %v404
    %406 = vmatmul.f32.gmra.mxu0 %v334
    %v407 = vpop.f32.mrf.mxu0
    %v408 = vadd.f32 %v358, %v407
    %409 = vmatmul.f32.gmra.mxu0 %v335
    %v410 = vpop.f32.mrf.mxu0
    %v411 = vadd.f32 %v358, %v410
    %412 = vmatmul.f32.gmra.mxu0 %v336
    %v413 = vpop.f32.mrf.mxu0
    %v414 = vadd.f32 %v358, %v413
    %415 = vmatmul.f32.gmra.mxu0 %v337
    %v416 = vpop.f32.mrf.mxu0
    %v417 = vadd.f32 %v358, %v416
    %418 = vmatmul.f32.gmra.mxu0 %v338
    %v419 = vpop.f32.mrf.mxu0
    %v420 = vadd.f32 %v358, %v419
    %421 = vmatmul.f32.gmra.mxu0 %v339
    %v422 = vpop.f32.mrf.mxu0
    %v423 = vadd.f32 %v358, %v422
    %424 = vdwg.mxu0
    %v425 = vmax.f32 %v378, 0.0
    %v426 = vmax.f32 %v381, 0.0
    %v427 = vmax.f32 %v384, 0.0
    %v428 = vmax.f32 %v387, 0.0
    %v429 = vmax.f32 %v390, 0.0
    %v430 = vmax.f32 %v393, 0.0
    %v431 = vmax.f32 %v396, 0.0
    %v432 = vmax.f32 %v399, 0.0
    %v433 = vmax.f32 %v402, 0.0
    %v434 = vmax.f32 %v405, 0.0
    %v435 = vmax.f32 %v408, 0.0
    %v436 = vmax.f32 %v411, 0.0
    %v437 = vmax.f32 %v414, 0.0
    %v438 = vmax.f32 %v417, 0.0
    %v439 = vmax.f32 %v420, 0.0
    %v440 = vmax.f32 %v423, 0.0
    %v441 = vld [vmem:[#allocation11] sm:$0xff]
    %v442 = vld [vmem:[#allocation11 + $0x8] sm:$0xff]
    %v443 = vld [vmem:[#allocation11 + $0x10] sm:$0xff]
    %v444 = vld [vmem:[#allocation11 + $0x18] sm:$0xff]
    %v445 = vld [vmem:[#allocation11 + $0x20] sm:$0xff]
    %v446 = vld [vmem:[#allocation11 + $0x28] sm:$0xff]
    %v447 = vld [vmem:[#allocation11 + $0x30] sm:$0xff]
    %v448 = vld [vmem:[#allocation11 + $0x38] sm:$0xff]
    %v449 = vld [vmem:[#allocation11 + $0x40] sm:$0xff]
    %v450 = vld [vmem:[#allocation11 + $0x48] sm:$0xff]
    %v451 = vld [vmem:[#allocation11 + $0x50] sm:$0xff]
    %v452 = vld [vmem:[#allocation11 + $0x58] sm:$0xff]
    %v453 = vld [vmem:[#allocation11 + $0x60] sm:$0xff]
    %v454 = vld [vmem:[#allocation11 + $0x68] sm:$0xff]
    %v455 = vld [vmem:[#allocation11 + $0x70] sm:$0xff]
    %v456 = vld [vmem:[#allocation11 + $0x78] sm:$0xff]
    %v457 = vld [vmem:[%s7] sm:$0x1]
    %v459 = vperm.slane %v457, 0
    %461 = vmatpush.msra.mxu0 %v456
    %462 = vmatpush.msra.mxu0 %v455
    %463 = vmatpush.msra.mxu0 %v454
    %464 = vmatpush.msra.mxu0 %v453
    %465 = vmatpush.msra.mxu0 %v452
    %466 = vmatpush.msra.mxu0 %v451
    %467 = vmatpush.msra.mxu0 %v450
    %468 = vmatpush.msra.mxu0 %v449
    %469 = vmatpush.msra.mxu0 %v448
    %470 = vmatpush.msra.mxu0 %v447
    %471 = vmatpush.msra.mxu0 %v446
    %472 = vmatpush.msra.mxu0 %v445
    %473 = vmatpush.msra.mxu0 %v444
    %474 = vmatpush.msra.mxu0 %v443
    %475 = vmatpush.msra.mxu0 %v442
    %476 = vmatpush.msra.mxu0 %v441
    %477 = vmatmul.f32.gmra.mxu0 %v425
    %v478 = vpop.f32.mrf.mxu0
    %v479 = vadd.f32 %v459, %v478
    %480 = vmatmul.f32.gmra.mxu0 %v426
    %v481 = vpop.f32.mrf.mxu0
    %v482 = vadd.f32 %v459, %v481
    %483 = vmatmul.f32.gmra.mxu0 %v427
    %v484 = vpop.f32.mrf.mxu0
    %v485 = vadd.f32 %v459, %v484
    %486 = vmatmul.f32.gmra.mxu0 %v428
    %v487 = vpop.f32.mrf.mxu0
    %v488 = vadd.f32 %v459, %v487
    %489 = vmatmul.f32.gmra.mxu0 %v429
    %v490 = vpop.f32.mrf.mxu0
    %v491 = vadd.f32 %v459, %v490
    %492 = vmatmul.f32.gmra.mxu0 %v430
    %v493 = vpop.f32.mrf.mxu0
    %v494 = vadd.f32 %v459, %v493
    %495 = vmatmul.f32.gmra.mxu0 %v431
    %v496 = vpop.f32.mrf.mxu0
    %v497 = vadd.f32 %v459, %v496
    %498 = vmatmul.f32.gmra.mxu0 %v432
    %v499 = vpop.f32.mrf.mxu0
    %v500 = vadd.f32 %v459, %v499
    %501 = vmatmul.f32.gmra.mxu0 %v433
    %v502 = vpop.f32.mrf.mxu0
    %v503 = vadd.f32 %v459, %v502
    %504 = vmatmul.f32.gmra.mxu0 %v434
    %v505 = vpop.f32.mrf.mxu0
    %v506 = vadd.f32 %v459, %v505
    %507 = vmatmul.f32.gmra.mxu0 %v435
    %v508 = vpop.f32.mrf.mxu0
    %v509 = vadd.f32 %v459, %v508
    %510 = vmatmul.f32.gmra.mxu0 %v436
    %v511 = vpop.f32.mrf.mxu0
    %v512 = vadd.f32 %v459, %v511
    %513 = vmatmul.f32.gmra.mxu0 %v437
    %v514 = vpop.f32.mrf.mxu0
    %v515 = vadd.f32 %v459, %v514
    %516 = vmatmul.f32.gmra.mxu0 %v438
    %v517 = vpop.f32.mrf.mxu0
    %v518 = vadd.f32 %v459, %v517
    %519 = vmatmul.f32.gmra.mxu0 %v439
    %v520 = vpop.f32.mrf.mxu0
    %v521 = vadd.f32 %v459, %v520
    %522 = vmatmul.f32.gmra.mxu0 %v440
    %v523 = vpop.f32.mrf.mxu0
    %v524 = vadd.f32 %v459, %v523
    %525 = vdwg.mxu0
    %v526 = vmax.f32 %v479, 0.0
    %v527 = vmax.f32 %v482, 0.0
    %v528 = vmax.f32 %v485, 0.0
    %v529 = vmax.f32 %v488, 0.0
    %v530 = vmax.f32 %v491, 0.0
    %v531 = vmax.f32 %v494, 0.0
    %v532 = vmax.f32 %v497, 0.0
    %v533 = vmax.f32 %v500, 0.0
    %v534 = vmax.f32 %v503, 0.0
    %v535 = vmax.f32 %v506, 0.0
    %v536 = vmax.f32 %v509, 0.0
    %v537 = vmax.f32 %v512, 0.0
    %v538 = vmax.f32 %v515, 0.0
    %v539 = vmax.f32 %v518, 0.0
    %v540 = vmax.f32 %v521, 0.0
    %v541 = vmax.f32 %v524, 0.0
    %542 = vst [vmem:[#allocation12] sm:$0xff] %v526
    %543 = vst [vmem:[#allocation12 + $0x8] sm:$0xff] %v527
    %544 = vst [vmem:[#allocation12 + $0x10] sm:$0xff] %v528
    %545 = vst [vmem:[#allocation12 + $0x18] sm:$0xff] %v529
    %546 = vst [vmem:[#allocation12 + $0x20] sm:$0xff] %v530
    %547 = vst [vmem:[#allocation12 + $0x28] sm:$0xff] %v531
    %548 = vst [vmem:[#allocation12 + $0x30] sm:$0xff] %v532
    %549 = vst [vmem:[#allocation12 + $0x38] sm:$0xff] %v533
    %550 = vst [vmem:[#allocation12 + $0x40] sm:$0xff] %v534
    %551 = vst [vmem:[#allocation12 + $0x48] sm:$0xff] %v535
    %552 = vst [vmem:[#allocation12 + $0x50] sm:$0xff] %v536
    %553 = vst [vmem:[#allocation12 + $0x58] sm:$0xff] %v537
    %554 = vst [vmem:[#allocation12 + $0x60] sm:$0xff] %v538
    %555 = vst [vmem:[#allocation12 + $0x68] sm:$0xff] %v539
    %556 = vst [vmem:[#allocation12 + $0x70] sm:$0xff] %v540
    %557 = vst [vmem:[#allocation12 + $0x78] sm:$0xff] %v541
    %v558 = vpack.c.bf16 %v526, %v526
    %v559 = vpack.c.bf16 %v527, %v527
    %v560 = vpack.c.bf16 %v528, %v528
    %v561 = vpack.c.bf16 %v529, %v529
    %v562 = vpack.c.bf16 %v530, %v530
    %v563 = vpack.c.bf16 %v531, %v531
    %v564 = vpack.c.bf16 %v532, %v532
    %v565 = vpack.c.bf16 %v533, %v533
    %v566 = vpack.c.bf16 %v534, %v534
    %v567 = vpack.c.bf16 %v535, %v535
    %v568 = vpack.c.bf16 %v536, %v536
    %v569 = vpack.c.bf16 %v537, %v537
    %v570 = vpack.c.bf16 %v538, %v538
    %v571 = vpack.c.bf16 %v539, %v539
    %v572 = vpack.c.bf16 %v540, %v540
    %v573 = vpack.c.bf16 %v541, %v541
    %574 = vst [vmem:[#allocation13] sm:$0xf] %v558
    %575 = vst [vmem:[#allocation13 + $0x4] sm:$0xf] %v559
    %576 = vst [vmem:[#allocation13 + $0x8] sm:$0xf] %v560
    %577 = vst [vmem:[#allocation13 + $0xc] sm:$0xf] %v561
    %578 = vst [vmem:[#allocation13 + $0x10] sm:$0xf] %v562
    %579 = vst [vmem:[#allocation13 + $0x14] sm:$0xf] %v563
    %580 = vst [vmem:[#allocation13 + $0x18] sm:$0xf] %v564
    %581 = vst [vmem:[#allocation13 + $0x1c] sm:$0xf] %v565
    %582 = vst [vmem:[#allocation13 + $0x20] sm:$0xf] %v566
    %583 = vst [vmem:[#allocation13 + $0x24] sm:$0xf] %v567
    %584 = vst [vmem:[#allocation13 + $0x28] sm:$0xf] %v568
    %585 = vst [vmem:[#allocation13 + $0x2c] sm:$0xf] %v569
    %586 = vst [vmem:[#allocation13 + $0x30] sm:$0xf] %v570
    %587 = vst [vmem:[#allocation13 + $0x34] sm:$0xf] %v571
    %588 = vst [vmem:[#allocation13 + $0x38] sm:$0xf] %v572
    %589 = vst [vmem:[#allocation13 + $0x3c] sm:$0xf] %v573
    // Predicated region
    $region54: #{tpu_custom_call.1} parent=1 // pred_check
      _
    $region55: #{tpu_custom_call.1} parent=1 // pred_check_branch
      %591 = sbr.rel (0) target = $region57
    $region56: #{tpu_custom_call.1} parent=1 // pred_region
      %593 = vsyncadd [#allocation5], 0
      %s594 = sshll.u32 [#allocation12], 4
      %s595 = int_to_ptr.vmem [resolvable:$true] %s594
      %s596 = sshll.u32 %s8, 4
      %s597 = int_to_ptr.hbm [resolvable:$true] %s596
      %602 = dma.vmem_to_hbm [thread:$0]  %s595, 2048, %s597, [#allocation5], 128, 128, 8
    $region57: #{tpu_custom_call.1} parent=1 // pred_fallthru
      _
    // Predicated region
    $region58: #{tpu_custom_call.1} parent=1 // pred_check
      _
    $region59: #{tpu_custom_call.1} parent=1 // pred_check_branch
      %604 = sbr.rel (0) target = $region61
    $region60: #{tpu_custom_call.1} parent=1 // pred_region
      %606 = vsyncadd [#allocation14], 0
      %s607 = sshll.u32 [#allocation13], 4
      %s608 = int_to_ptr.vmem [resolvable:$true] %s607
      %s609 = sshll.u32 %s9, 4
      %s610 = int_to_ptr.hbm [resolvable:$true] %s609
      %615 = dma.vmem_to_hbm [thread:$0]  %s608, 1024, %s610, [#allocation14], 64, 64, 4
    $region61: #{tpu_custom_call.1} parent=1 // pred_fallthru
      _
    // Predicated region
    $region62: #{tpu_custom_call.1} parent=1 // pred_check
      _
    $region63: #{tpu_custom_call.1} parent=1 // pred_check_branch
      %617 = sbr.rel (0) target = $region65
    $region64: #{tpu_custom_call.1} parent=1 // pred_region
      %619 = dma.done [#allocation5], 2048
    $region65: #{tpu_custom_call.1} parent=1 // pred_fallthru
      _
    // Predicated region
    $region66: #{tpu_custom_call.1} parent=1 // pred_check
      _
    $region67: #{tpu_custom_call.1} parent=1 // pred_check_branch
      %621 = sbr.rel (0) target = $region69
    $region68: #{tpu_custom_call.1} parent=1 // pred_region
      %623 = dma.done [#allocation14], 1024
    $region69: #{tpu_custom_call.1} parent=1 // pred_fallthru
      _
    %624 = vsyncpa [#allocation4], 1
    %625 = vsyncpa [#allocation7], 1
    %626 = vsyncpa [#allocation10], 1
    %627 = vsyncpa [#allocation5], 1
    %628 = vsyncpa [#allocation14], 1

</llo_original>
